<compile_context>
chip_gen: v7x
topology: tpu7x:2x2x1
jax: 0.10.0
libtpu: 0.0.40
codegen_flags: <defaults>
</compile_context>

<pallas_src>
import jax
import jax.numpy as jnp
from jax.experimental import pallas as pl
from jax.experimental.pallas import tpu as pltpu

LANE = 128
SUBLANE = 8


def _round_up(n, m):
    return ((n + m - 1) // m) * m


def fasttext_kernel(idx_w_ref, idx_b_ref, idx_t_ref,
                    tab_w_ref, tab_b_ref, tab_t_ref,
                    b1_ref, w2_ref, b2_ref, out_ref):
    """Fused FastText forward for one batch tile (all operands in VMEM).

    fc1 and the 1/S mean are pre-folded into the embedding tables, so per
    stream the kernel only needs:
        counts[b, v] = #{s : idx[b, s] == v}   (VPU one-hot accumulate)
        h += counts @ fused_table               (MXU)
    followed by bias + ReLU and the fc2 matmul.
    """
    tb, seq = idx_w_ref.shape

    # Hoisted iotas: one per distinct padded vocab width per kernel invocation
    # (JAX/Mosaic does not CSE broadcast_in_dim, so never rebuild per stream).
    iota_cache = {}

    def stream_counts(idx_ref, vpad):
        if vpad not in iota_cache:
            iota_cache[vpad] = jax.lax.broadcasted_iota(
                jnp.int32, (tb, vpad), 1)
        iota = iota_cache[vpad]
        idx = idx_ref[...]                                       # [tb, S] int32
        counts = jnp.zeros((tb, vpad), jnp.float32)
        for s in range(seq):  # S is small & static -> cheap unrolled VPU loop
            counts += (idx[:, s:s + 1] == iota).astype(jnp.float32)
        return counts                                            # [tb, Vp]

    cw = stream_counts(idx_w_ref, tab_w_ref.shape[0])
    cb = stream_counts(idx_b_ref, tab_b_ref.shape[0])
    ct = stream_counts(idx_t_ref, tab_t_ref.shape[0])

    # h = relu(mean(concat(word, bigram, trigram)) @ w1 + b1), with w1/S folded
    # into the per-stream tables -> three accumulated MXU dots, no concat.
    h = jnp.dot(cw, tab_w_ref[...], preferred_element_type=jnp.float32)
    h = h + jnp.dot(cb, tab_b_ref[...], preferred_element_type=jnp.float32)
    h = h + jnp.dot(ct, tab_t_ref[...], preferred_element_type=jnp.float32)
    h = jnp.maximum(h + b1_ref[...], 0.0)

    # Dropout is identity in eval mode.
    # TODO(synk): training-mode dropout (p=0.5) sits between the mean and fc1;
    # it needs the un-fused (table, w1) path plus pltpu.prng_* masking.

    out = jnp.dot(h, w2_ref[...], preferred_element_type=jnp.float32)
    out_ref[...] = (out + b2_ref[...]).astype(out_ref.dtype)


def prepare_params(emb_word, emb_bi, emb_tri, w1, b1, w2, b2, seq_len):
    """One-time parameter prep: fold fc1 + 1/S into the tables and pad to lanes.

    Call once at model-load time; the per-call path (fasttext_apply) only pads
    the integer index tensors.
    """
    Vw, E = emb_word.shape
    Vn = emb_bi.shape[0]
    H = w1.shape[1]
    C = w2.shape[1]

    Vw_p = _round_up(Vw, LANE)
    Vn_p = _round_up(Vn, LANE)
    H_p = _round_up(H, LANE)
    C_p = _round_up(C, LANE)

    f32 = jnp.float32

    def pad2(a, rows, cols):
        a = a.astype(f32)
        return jnp.pad(a, ((0, rows - a.shape[0]), (0, cols - a.shape[1])))

    inv_s = jnp.float32(1.0 / seq_len)
    w1f = w1.astype(f32)

    # Fused per-stream tables: (emb @ w1_chunk) / S, zero-padded vocab & H.
    tab_w = pad2(emb_word.astype(f32) @ w1f[:E] * inv_s, Vw_p, H_p)
    tab_b = pad2(emb_bi.astype(f32) @ w1f[E:2 * E] * inv_s, Vn_p, H_p)
    tab_t = pad2(emb_tri.astype(f32) @ w1f[2 * E:] * inv_s, Vn_p, H_p)

    b1p = pad2(b1.reshape(1, H), 1, H_p)
    w2p = pad2(w2, H_p, C_p)       # padded h columns are exactly 0
    b2p = pad2(b2.reshape(1, C), 1, C_p)

    return {"tab_w": tab_w, "tab_b": tab_b, "tab_t": tab_t,
            "b1": b1p, "w2": w2p, "b2": b2p, "class_num": C}


def fasttext_apply(params, x_word, x_bi, x_tri, *, tile_b=128):
    """Per-call path: pad indices, tile the batch, run the fused kernel."""
    B, S = x_word.shape
    tab_w, tab_b, tab_t = params["tab_w"], params["tab_b"], params["tab_t"]
    b1p, w2p, b2p = params["b1"], params["w2"], params["b2"]
    C = params["class_num"]
    Vw_p, H_p = tab_w.shape
    Vn_p = tab_b.shape[0]
    C_p = w2p.shape[1]

    # tile_b=128 feeds the MXU a full-height M and amortizes per-grid-step
    # overhead (sweep 64/128/256; cap at 128 on v5e, 256 on v6e/v7x).  Clamp
    # for tiny batches so padding-only rows don't become whole grid steps.
    tile_b = max(SUBLANE, min(tile_b, _round_up(B, SUBLANE)))
    B_p = _round_up(B, tile_b)

    def pad_idx(ix):
        return jnp.pad(ix.astype(jnp.int32), ((0, B_p - B), (0, 0)))

    xw, xb, xt = pad_idx(x_word), pad_idx(x_bi), pad_idx(x_tri)

    full = lambda i: (0, 0)
    batch_tile = lambda i: (i, 0)

    out_padded = pl.pallas_call(
        fasttext_kernel,
        out_shape=jax.ShapeDtypeStruct((B_p, C_p), jnp.float32),
        grid=(B_p // tile_b,),
        in_specs=[
            pl.BlockSpec((tile_b, S), batch_tile),   # word indices
            pl.BlockSpec((tile_b, S), batch_tile),   # bigram indices
            pl.BlockSpec((tile_b, S), batch_tile),   # trigram indices
            pl.BlockSpec((Vw_p, H_p), full),         # fused word table (emb@w1/S)
            pl.BlockSpec((Vn_p, H_p), full),         # fused bigram table
            pl.BlockSpec((Vn_p, H_p), full),         # fused trigram table
            pl.BlockSpec((1, H_p), full),            # b1
            pl.BlockSpec((H_p, C_p), full),          # w2
            pl.BlockSpec((1, C_p), full),            # b2
        ],
        out_specs=pl.BlockSpec((tile_b, C_p), batch_tile),
        compiler_params=pltpu.CompilerParams(
            dimension_semantics=("parallel",)),
    )(xw, xb, xt, tab_w, tab_b, tab_t, b1p, w2p, b2p)

    return out_padded[:B, :C]


def reference_forward(x_word, x_bi, x_tri, emb_word, emb_bi, emb_tri,
                      w1, b1, w2, b2):
    feat = jnp.concatenate(
        [emb_word[x_word], emb_bi[x_bi], emb_tri[x_tri]], axis=-1).mean(axis=1)
    h = jnp.maximum(feat @ w1 + b1, 0.0)
    return h @ w2 + b2


if __name__ == "__main__":
    # Small, forward-consistent shapes.
    vocab_size = 50
    ngram_size = 64
    embed_dim = 32
    hidden_size = 32
    class_num = 8
    B, S = 16, 8

    key = jax.random.PRNGKey(0)
    keys = jax.random.split(key, 10)

    # Deterministic parameter init (mirrors nn.Embedding / nn.Linear shapes).
    emb_word = jax.random.normal(keys[0], (vocab_size, embed_dim), jnp.float32) * 0.1
    emb_word = emb_word.at[0].set(0.0)  # padding_idx=0
    emb_bi = jax.random.normal(keys[1], (ngram_size, embed_dim), jnp.float32) * 0.1
    emb_tri = jax.random.normal(keys[2], (ngram_size, embed_dim), jnp.float32) * 0.1

    # Linear weights stored as [in, out] (transpose of PyTorch's [out, in]).
    w1 = jax.random.normal(keys[3], (embed_dim * 3, hidden_size), jnp.float32) * 0.05
    b1 = jax.random.normal(keys[4], (hidden_size,), jnp.float32) * 0.05
    w2 = jax.random.normal(keys[5], (hidden_size, class_num), jnp.float32) * 0.05
    b2 = jax.random.normal(keys[6], (class_num,), jnp.float32) * 0.05

    # Input x is a list of three [B, S] integer index tensors.
    x_word = jax.random.randint(keys[7], (B, S), 0, vocab_size, jnp.int32)
    x_bi = jax.random.randint(keys[8], (B, S), 0, ngram_size, jnp.int32)
    x_tri = jax.random.randint(keys[9], (B, S), 0, ngram_size, jnp.int32)

    # One-time weight prep (fold fc1 into the tables, pad), then apply.
    params = prepare_params(emb_word, emb_bi, emb_tri, w1, b1, w2, b2, seq_len=S)
    params = jax.tree_util.tree_map(
        lambda a: jax.block_until_ready(a) if isinstance(a, jax.Array) else a,
        params)

    out = fasttext_apply(params, x_word, x_bi, x_tri, tile_b=128)
    out = jax.block_until_ready(out)

    ref = reference_forward(x_word, x_bi, x_tri, emb_word, emb_bi, emb_tri,
                            w1, b1, w2, b2)
    assert out.shape == (B, class_num)
    assert jnp.allclose(out, ref, rtol=1e-4, atol=1e-4), "mismatch vs reference"

    print("KERNEL_OK")
</pallas_src>

<mosaic_0001>
module attributes {stable_mosaic.version = 11 : i64} {
  func.func @fasttext_kernel(%arg0: i32, %arg1: memref<16x8xi32, #tpu.memory_space<vmem>>, %arg2: memref<16x8xi32, #tpu.memory_space<vmem>>, %arg3: memref<16x8xi32, #tpu.memory_space<vmem>>, %arg4: memref<128x128xf32, #tpu.memory_space<vmem>>, %arg5: memref<128x128xf32, #tpu.memory_space<vmem>>, %arg6: memref<128x128xf32, #tpu.memory_space<vmem>>, %arg7: memref<1x128xf32, #tpu.memory_space<vmem>>, %arg8: memref<128x128xf32, #tpu.memory_space<vmem>>, %arg9: memref<1x128xf32, #tpu.memory_space<vmem>>, %arg10: memref<16x128xf32, #tpu.memory_space<vmem>>) attributes {dimension_semantics = [#tpu.dimension_semantics<parallel>], iteration_bounds = array<i64: 1>, scalar_prefetch = 0 : i64, scratch_operands = 0 : i64, tpu.core_type = #tpu.core_type<tc>, window_params = [{transform_indices = @transform_0, window_bounds = array<i64: 16, 8>}, {transform_indices = @transform_1, window_bounds = array<i64: 16, 8>}, {transform_indices = @transform_2, window_bounds = array<i64: 16, 8>}, {pipeline_mode = #tpu.pipeline_mode<synchronous>, transform_indices = @transform_3, window_bounds = array<i64: 128, 128>}, {pipeline_mode = #tpu.pipeline_mode<synchronous>, transform_indices = @transform_4, window_bounds = array<i64: 128, 128>}, {pipeline_mode = #tpu.pipeline_mode<synchronous>, transform_indices = @transform_5, window_bounds = array<i64: 128, 128>}, {pipeline_mode = #tpu.pipeline_mode<synchronous>, transform_indices = @transform_6, window_bounds = array<i64: 1, 128>}, {pipeline_mode = #tpu.pipeline_mode<synchronous>, transform_indices = @transform_7, window_bounds = array<i64: 128, 128>}, {pipeline_mode = #tpu.pipeline_mode<synchronous>, transform_indices = @transform_8, window_bounds = array<i64: 1, 128>}, {transform_indices = @transform_9, window_bounds = array<i64: 16, 128>}]} {
    %0 = tpu.iota {dimensions = array<i32: 1>} : vector<16x128xi32>
    %c0 = arith.constant 0 : index
    %c0_0 = arith.constant 0 : index
    %1 = vector.load %arg1[%c0, %c0_0] : memref<16x8xi32, #tpu.memory_space<vmem>>, vector<16x8xi32>
    %cst = arith.constant 0.000000e+00 : f32
    %2 = vector.broadcast %cst : f32 to vector<16x128xf32>
    %3 = vector.extract_strided_slice %1 {offsets = [0, 0], sizes = [16, 1], strides = [1, 1]} : vector<16x8xi32> to vector<16x1xi32>
    %4 = vector.broadcast %3 : vector<16x1xi32> to vector<16x128xi32>
    %5 = arith.cmpi eq, %4, %0 : vector<16x128xi32>
    %6 = arith.extui %5 : vector<16x128xi1> to vector<16x128xi32>
    %7 = arith.sitofp %6 : vector<16x128xi32> to vector<16x128xf32>
    %8 = arith.addf %2, %7 : vector<16x128xf32>
    %9 = vector.extract_strided_slice %1 {offsets = [0, 1], sizes = [16, 1], strides = [1, 1]} : vector<16x8xi32> to vector<16x1xi32>
    %10 = vector.broadcast %9 : vector<16x1xi32> to vector<16x128xi32>
    %11 = arith.cmpi eq, %10, %0 : vector<16x128xi32>
    %12 = arith.extui %11 : vector<16x128xi1> to vector<16x128xi32>
    %13 = arith.sitofp %12 : vector<16x128xi32> to vector<16x128xf32>
    %14 = arith.addf %8, %13 : vector<16x128xf32>
    %15 = vector.extract_strided_slice %1 {offsets = [0, 2], sizes = [16, 1], strides = [1, 1]} : vector<16x8xi32> to vector<16x1xi32>
    %16 = vector.broadcast %15 : vector<16x1xi32> to vector<16x128xi32>
    %17 = arith.cmpi eq, %16, %0 : vector<16x128xi32>
    %18 = arith.extui %17 : vector<16x128xi1> to vector<16x128xi32>
    %19 = arith.sitofp %18 : vector<16x128xi32> to vector<16x128xf32>
    %20 = arith.addf %14, %19 : vector<16x128xf32>
    %21 = vector.extract_strided_slice %1 {offsets = [0, 3], sizes = [16, 1], strides = [1, 1]} : vector<16x8xi32> to vector<16x1xi32>
    %22 = vector.broadcast %21 : vector<16x1xi32> to vector<16x128xi32>
    %23 = arith.cmpi eq, %22, %0 : vector<16x128xi32>
    %24 = arith.extui %23 : vector<16x128xi1> to vector<16x128xi32>
    %25 = arith.sitofp %24 : vector<16x128xi32> to vector<16x128xf32>
    %26 = arith.addf %20, %25 : vector<16x128xf32>
    %27 = vector.extract_strided_slice %1 {offsets = [0, 4], sizes = [16, 1], strides = [1, 1]} : vector<16x8xi32> to vector<16x1xi32>
    %28 = vector.broadcast %27 : vector<16x1xi32> to vector<16x128xi32>
    %29 = arith.cmpi eq, %28, %0 : vector<16x128xi32>
    %30 = arith.extui %29 : vector<16x128xi1> to vector<16x128xi32>
    %31 = arith.sitofp %30 : vector<16x128xi32> to vector<16x128xf32>
    %32 = arith.addf %26, %31 : vector<16x128xf32>
    %33 = vector.extract_strided_slice %1 {offsets = [0, 5], sizes = [16, 1], strides = [1, 1]} : vector<16x8xi32> to vector<16x1xi32>
    %34 = vector.broadcast %33 : vector<16x1xi32> to vector<16x128xi32>
    %35 = arith.cmpi eq, %34, %0 : vector<16x128xi32>
    %36 = arith.extui %35 : vector<16x128xi1> to vector<16x128xi32>
    %37 = arith.sitofp %36 : vector<16x128xi32> to vector<16x128xf32>
    %38 = arith.addf %32, %37 : vector<16x128xf32>
    %39 = vector.extract_strided_slice %1 {offsets = [0, 6], sizes = [16, 1], strides = [1, 1]} : vector<16x8xi32> to vector<16x1xi32>
    %40 = vector.broadcast %39 : vector<16x1xi32> to vector<16x128xi32>
    %41 = arith.cmpi eq, %40, %0 : vector<16x128xi32>
    %42 = arith.extui %41 : vector<16x128xi1> to vector<16x128xi32>
    %43 = arith.sitofp %42 : vector<16x128xi32> to vector<16x128xf32>
    %44 = arith.addf %38, %43 : vector<16x128xf32>
    %45 = vector.extract_strided_slice %1 {offsets = [0, 7], sizes = [16, 1], strides = [1, 1]} : vector<16x8xi32> to vector<16x1xi32>
    %46 = vector.broadcast %45 : vector<16x1xi32> to vector<16x128xi32>
    %47 = arith.cmpi eq, %46, %0 : vector<16x128xi32>
    %48 = arith.extui %47 : vector<16x128xi1> to vector<16x128xi32>
    %49 = arith.sitofp %48 : vector<16x128xi32> to vector<16x128xf32>
    %50 = arith.addf %44, %49 : vector<16x128xf32>
    %c0_1 = arith.constant 0 : index
    %c0_2 = arith.constant 0 : index
    %51 = vector.load %arg2[%c0_1, %c0_2] : memref<16x8xi32, #tpu.memory_space<vmem>>, vector<16x8xi32>
    %cst_3 = arith.constant 0.000000e+00 : f32
    %52 = vector.broadcast %cst_3 : f32 to vector<16x128xf32>
    %53 = vector.extract_strided_slice %51 {offsets = [0, 0], sizes = [16, 1], strides = [1, 1]} : vector<16x8xi32> to vector<16x1xi32>
    %54 = vector.broadcast %53 : vector<16x1xi32> to vector<16x128xi32>
    %55 = arith.cmpi eq, %54, %0 : vector<16x128xi32>
    %56 = arith.extui %55 : vector<16x128xi1> to vector<16x128xi32>
    %57 = arith.sitofp %56 : vector<16x128xi32> to vector<16x128xf32>
    %58 = arith.addf %52, %57 : vector<16x128xf32>
    %59 = vector.extract_strided_slice %51 {offsets = [0, 1], sizes = [16, 1], strides = [1, 1]} : vector<16x8xi32> to vector<16x1xi32>
    %60 = vector.broadcast %59 : vector<16x1xi32> to vector<16x128xi32>
    %61 = arith.cmpi eq, %60, %0 : vector<16x128xi32>
    %62 = arith.extui %61 : vector<16x128xi1> to vector<16x128xi32>
    %63 = arith.sitofp %62 : vector<16x128xi32> to vector<16x128xf32>
    %64 = arith.addf %58, %63 : vector<16x128xf32>
    %65 = vector.extract_strided_slice %51 {offsets = [0, 2], sizes = [16, 1], strides = [1, 1]} : vector<16x8xi32> to vector<16x1xi32>
    %66 = vector.broadcast %65 : vector<16x1xi32> to vector<16x128xi32>
    %67 = arith.cmpi eq, %66, %0 : vector<16x128xi32>
    %68 = arith.extui %67 : vector<16x128xi1> to vector<16x128xi32>
    %69 = arith.sitofp %68 : vector<16x128xi32> to vector<16x128xf32>
    %70 = arith.addf %64, %69 : vector<16x128xf32>
    %71 = vector.extract_strided_slice %51 {offsets = [0, 3], sizes = [16, 1], strides = [1, 1]} : vector<16x8xi32> to vector<16x1xi32>
    %72 = vector.broadcast %71 : vector<16x1xi32> to vector<16x128xi32>
    %73 = arith.cmpi eq, %72, %0 : vector<16x128xi32>
    %74 = arith.extui %73 : vector<16x128xi1> to vector<16x128xi32>
    %75 = arith.sitofp %74 : vector<16x128xi32> to vector<16x128xf32>
    %76 = arith.addf %70, %75 : vector<16x128xf32>
    %77 = vector.extract_strided_slice %51 {offsets = [0, 4], sizes = [16, 1], strides = [1, 1]} : vector<16x8xi32> to vector<16x1xi32>
    %78 = vector.broadcast %77 : vector<16x1xi32> to vector<16x128xi32>
    %79 = arith.cmpi eq, %78, %0 : vector<16x128xi32>
    %80 = arith.extui %79 : vector<16x128xi1> to vector<16x128xi32>
    %81 = arith.sitofp %80 : vector<16x128xi32> to vector<16x128xf32>
    %82 = arith.addf %76, %81 : vector<16x128xf32>
    %83 = vector.extract_strided_slice %51 {offsets = [0, 5], sizes = [16, 1], strides = [1, 1]} : vector<16x8xi32> to vector<16x1xi32>
    %84 = vector.broadcast %83 : vector<16x1xi32> to vector<16x128xi32>
    %85 = arith.cmpi eq, %84, %0 : vector<16x128xi32>
    %86 = arith.extui %85 : vector<16x128xi1> to vector<16x128xi32>
    %87 = arith.sitofp %86 : vector<16x128xi32> to vector<16x128xf32>
    %88 = arith.addf %82, %87 : vector<16x128xf32>
    %89 = vector.extract_strided_slice %51 {offsets = [0, 6], sizes = [16, 1], strides = [1, 1]} : vector<16x8xi32> to vector<16x1xi32>
    %90 = vector.broadcast %89 : vector<16x1xi32> to vector<16x128xi32>
    %91 = arith.cmpi eq, %90, %0 : vector<16x128xi32>
    %92 = arith.extui %91 : vector<16x128xi1> to vector<16x128xi32>
    %93 = arith.sitofp %92 : vector<16x128xi32> to vector<16x128xf32>
    %94 = arith.addf %88, %93 : vector<16x128xf32>
    %95 = vector.extract_strided_slice %51 {offsets = [0, 7], sizes = [16, 1], strides = [1, 1]} : vector<16x8xi32> to vector<16x1xi32>
    %96 = vector.broadcast %95 : vector<16x1xi32> to vector<16x128xi32>
    %97 = arith.cmpi eq, %96, %0 : vector<16x128xi32>
    %98 = arith.extui %97 : vector<16x128xi1> to vector<16x128xi32>
    %99 = arith.sitofp %98 : vector<16x128xi32> to vector<16x128xf32>
    %100 = arith.addf %94, %99 : vector<16x128xf32>
    %c0_4 = arith.constant 0 : index
    %c0_5 = arith.constant 0 : index
    %101 = vector.load %arg3[%c0_4, %c0_5] : memref<16x8xi32, #tpu.memory_space<vmem>>, vector<16x8xi32>
    %cst_6 = arith.constant 0.000000e+00 : f32
    %102 = vector.broadcast %cst_6 : f32 to vector<16x128xf32>
    %103 = vector.extract_strided_slice %101 {offsets = [0, 0], sizes = [16, 1], strides = [1, 1]} : vector<16x8xi32> to vector<16x1xi32>
    %104 = vector.broadcast %103 : vector<16x1xi32> to vector<16x128xi32>
    %105 = arith.cmpi eq, %104, %0 : vector<16x128xi32>
    %106 = arith.extui %105 : vector<16x128xi1> to vector<16x128xi32>
    %107 = arith.sitofp %106 : vector<16x128xi32> to vector<16x128xf32>
    %108 = arith.addf %102, %107 : vector<16x128xf32>
    %109 = vector.extract_strided_slice %101 {offsets = [0, 1], sizes = [16, 1], strides = [1, 1]} : vector<16x8xi32> to vector<16x1xi32>
    %110 = vector.broadcast %109 : vector<16x1xi32> to vector<16x128xi32>
    %111 = arith.cmpi eq, %110, %0 : vector<16x128xi32>
    %112 = arith.extui %111 : vector<16x128xi1> to vector<16x128xi32>
    %113 = arith.sitofp %112 : vector<16x128xi32> to vector<16x128xf32>
    %114 = arith.addf %108, %113 : vector<16x128xf32>
    %115 = vector.extract_strided_slice %101 {offsets = [0, 2], sizes = [16, 1], strides = [1, 1]} : vector<16x8xi32> to vector<16x1xi32>
    %116 = vector.broadcast %115 : vector<16x1xi32> to vector<16x128xi32>
    %117 = arith.cmpi eq, %116, %0 : vector<16x128xi32>
    %118 = arith.extui %117 : vector<16x128xi1> to vector<16x128xi32>
    %119 = arith.sitofp %118 : vector<16x128xi32> to vector<16x128xf32>
    %120 = arith.addf %114, %119 : vector<16x128xf32>
    %121 = vector.extract_strided_slice %101 {offsets = [0, 3], sizes = [16, 1], strides = [1, 1]} : vector<16x8xi32> to vector<16x1xi32>
    %122 = vector.broadcast %121 : vector<16x1xi32> to vector<16x128xi32>
    %123 = arith.cmpi eq, %122, %0 : vector<16x128xi32>
    %124 = arith.extui %123 : vector<16x128xi1> to vector<16x128xi32>
    %125 = arith.sitofp %124 : vector<16x128xi32> to vector<16x128xf32>
    %126 = arith.addf %120, %125 : vector<16x128xf32>
    %127 = vector.extract_strided_slice %101 {offsets = [0, 4], sizes = [16, 1], strides = [1, 1]} : vector<16x8xi32> to vector<16x1xi32>
    %128 = vector.broadcast %127 : vector<16x1xi32> to vector<16x128xi32>
    %129 = arith.cmpi eq, %128, %0 : vector<16x128xi32>
    %130 = arith.extui %129 : vector<16x128xi1> to vector<16x128xi32>
    %131 = arith.sitofp %130 : vector<16x128xi32> to vector<16x128xf32>
    %132 = arith.addf %126, %131 : vector<16x128xf32>
    %133 = vector.extract_strided_slice %101 {offsets = [0, 5], sizes = [16, 1], strides = [1, 1]} : vector<16x8xi32> to vector<16x1xi32>
    %134 = vector.broadcast %133 : vector<16x1xi32> to vector<16x128xi32>
    %135 = arith.cmpi eq, %134, %0 : vector<16x128xi32>
    %136 = arith.extui %135 : vector<16x128xi1> to vector<16x128xi32>
    %137 = arith.sitofp %136 : vector<16x128xi32> to vector<16x128xf32>
    %138 = arith.addf %132, %137 : vector<16x128xf32>
    %139 = vector.extract_strided_slice %101 {offsets = [0, 6], sizes = [16, 1], strides = [1, 1]} : vector<16x8xi32> to vector<16x1xi32>
    %140 = vector.broadcast %139 : vector<16x1xi32> to vector<16x128xi32>
    %141 = arith.cmpi eq, %140, %0 : vector<16x128xi32>
    %142 = arith.extui %141 : vector<16x128xi1> to vector<16x128xi32>
    %143 = arith.sitofp %142 : vector<16x128xi32> to vector<16x128xf32>
    %144 = arith.addf %138, %143 : vector<16x128xf32>
    %145 = vector.extract_strided_slice %101 {offsets = [0, 7], sizes = [16, 1], strides = [1, 1]} : vector<16x8xi32> to vector<16x1xi32>
    %146 = vector.broadcast %145 : vector<16x1xi32> to vector<16x128xi32>
    %147 = arith.cmpi eq, %146, %0 : vector<16x128xi32>
    %148 = arith.extui %147 : vector<16x128xi1> to vector<16x128xi32>
    %149 = arith.sitofp %148 : vector<16x128xi32> to vector<16x128xf32>
    %150 = arith.addf %144, %149 : vector<16x128xf32>
    %c0_7 = arith.constant 0 : index
    %c0_8 = arith.constant 0 : index
    %151 = vector.load %arg4[%c0_7, %c0_8] : memref<128x128xf32, #tpu.memory_space<vmem>>, vector<128x128xf32>
    %cst_9 = arith.constant dense<0.000000e+00> : vector<16x128xf32>
    %152 = tpu.matmul %50, %151, %cst_9 {dimension_numbers = #tpu.dot_dimension_numbers<[1], [0], [0], [1], [0, 0, 1, 1], [], []>} : vector<16x128xf32>, vector<128x128xf32>, vector<16x128xf32> -> vector<16x128xf32>
    %c0_10 = arith.constant 0 : index
    %c0_11 = arith.constant 0 : index
    %153 = vector.load %arg5[%c0_10, %c0_11] : memref<128x128xf32, #tpu.memory_space<vmem>>, vector<128x128xf32>
    %cst_12 = arith.constant dense<0.000000e+00> : vector<16x128xf32>
    %154 = tpu.matmul %100, %153, %cst_12 {dimension_numbers = #tpu.dot_dimension_numbers<[1], [0], [0], [1], [0, 0, 1, 1], [], []>} : vector<16x128xf32>, vector<128x128xf32>, vector<16x128xf32> -> vector<16x128xf32>
    %155 = arith.addf %152, %154 : vector<16x128xf32>
    %c0_13 = arith.constant 0 : index
    %c0_14 = arith.constant 0 : index
    %156 = vector.load %arg6[%c0_13, %c0_14] : memref<128x128xf32, #tpu.memory_space<vmem>>, vector<128x128xf32>
    %cst_15 = arith.constant dense<0.000000e+00> : vector<16x128xf32>
    %157 = tpu.matmul %150, %156, %cst_15 {dimension_numbers = #tpu.dot_dimension_numbers<[1], [0], [0], [1], [0, 0, 1, 1], [], []>} : vector<16x128xf32>, vector<128x128xf32>, vector<16x128xf32> -> vector<16x128xf32>
    %158 = arith.addf %155, %157 : vector<16x128xf32>
    %c0_16 = arith.constant 0 : index
    %c0_17 = arith.constant 0 : index
    %159 = vector.load %arg7[%c0_16, %c0_17] : memref<1x128xf32, #tpu.memory_space<vmem>>, vector<1x128xf32>
    %160 = vector.broadcast %159 : vector<1x128xf32> to vector<16x128xf32>
    %161 = arith.addf %158, %160 : vector<16x128xf32>
    %cst_18 = arith.constant 0.000000e+00 : f32
    %162 = vector.broadcast %cst_18 : f32 to vector<16x128xf32>
    %163 = arith.maximumf %161, %162 : vector<16x128xf32>
    %c0_19 = arith.constant 0 : index
    %c0_20 = arith.constant 0 : index
    %164 = vector.load %arg8[%c0_19, %c0_20] : memref<128x128xf32, #tpu.memory_space<vmem>>, vector<128x128xf32>
    %cst_21 = arith.constant dense<0.000000e+00> : vector<16x128xf32>
    %165 = tpu.matmul %163, %164, %cst_21 {dimension_numbers = #tpu.dot_dimension_numbers<[1], [0], [0], [1], [0, 0, 1, 1], [], []>} : vector<16x128xf32>, vector<128x128xf32>, vector<16x128xf32> -> vector<16x128xf32>
    %c0_22 = arith.constant 0 : index
    %c0_23 = arith.constant 0 : index
    %166 = vector.load %arg9[%c0_22, %c0_23] : memref<1x128xf32, #tpu.memory_space<vmem>>, vector<1x128xf32>
    %167 = vector.broadcast %166 : vector<1x128xf32> to vector<16x128xf32>
    %168 = arith.addf %165, %167 : vector<16x128xf32>
    %c0_24 = arith.constant 0 : index
    %c0_25 = arith.constant 0 : index
    %169 = vector.load %arg10[%c0_24, %c0_25] : memref<16x128xf32, #tpu.memory_space<vmem>>, vector<16x128xf32>
    tpu.vector_store %arg10[%c0_24, %c0_25], %168 {strides = array<i32>} : memref<16x128xf32, #tpu.memory_space<vmem>>, vector<16x128xf32>,
    return
  }
  func.func @transform_0(%arg0: i32) -> (i32, i32) {
    %c0_i32 = arith.constant 0 : i32
    %c0_i32_0 = arith.constant 0 : i32
    return %arg0, %c0_i32 : i32, i32
  }
  func.func @transform_1(%arg0: i32) -> (i32, i32) {
    %c0_i32 = arith.constant 0 : i32
    %c0_i32_0 = arith.constant 0 : i32
    return %arg0, %c0_i32 : i32, i32
  }
  func.func @transform_2(%arg0: i32) -> (i32, i32) {
    %c0_i32 = arith.constant 0 : i32
    %c0_i32_0 = arith.constant 0 : i32
    return %arg0, %c0_i32 : i32, i32
  }
  func.func @transform_3(%arg0: i32) -> (i32, i32) {
    %c0_i32 = arith.constant 0 : i32
    %c0_i32_0 = arith.constant 0 : i32
    %c0_i32_1 = arith.constant 0 : i32
    return %c0_i32, %c0_i32_0 : i32, i32
  }
  func.func @transform_4(%arg0: i32) -> (i32, i32) {
    %c0_i32 = arith.constant 0 : i32
    %c0_i32_0 = arith.constant 0 : i32
    %c0_i32_1 = arith.constant 0 : i32
    return %c0_i32, %c0_i32_0 : i32, i32
  }
  func.func @transform_5(%arg0: i32) -> (i32, i32) {
    %c0_i32 = arith.constant 0 : i32
    %c0_i32_0 = arith.constant 0 : i32
    %c0_i32_1 = arith.constant 0 : i32
    return %c0_i32, %c0_i32_0 : i32, i32
  }
  func.func @transform_6(%arg0: i32) -> (i32, i32) {
    %c0_i32 = arith.constant 0 : i32
    %c0_i32_0 = arith.constant 0 : i32
    %c0_i32_1 = arith.constant 0 : i32
    return %c0_i32, %c0_i32_0 : i32, i32
  }
  func.func @transform_7(%arg0: i32) -> (i32, i32) {
    %c0_i32 = arith.constant 0 : i32
    %c0_i32_0 = arith.constant 0 : i32
    %c0_i32_1 = arith.constant 0 : i32
    return %c0_i32, %c0_i32_0 : i32, i32
  }
  func.func @transform_8(%arg0: i32) -> (i32, i32) {
    %c0_i32 = arith.constant 0 : i32
    %c0_i32_0 = arith.constant 0 : i32
    %c0_i32_1 = arith.constant 0 : i32
    return %c0_i32, %c0_i32_0 : i32, i32
  }
  func.func @transform_9(%arg0: i32) -> (i32, i32) {
    %c0_i32 = arith.constant 0 : i32
    %c0_i32_0 = arith.constant 0 : i32
    return %arg0, %c0_i32 : i32, i32
  }
}

</mosaic_0001>

<llo_original>
// kernel: tpu_custom_call.1
$region0: #{tpu_custom_call.1}
  #allocation0 [shape = 'u32[]', space=smem, size = 0x4, offset = 0x4, fixed_abs, tag = 'smem constant byte address 0x4 - core index']
  #allocation1 [shape = 'u32[144,128]{1,0:T(1,128)}', space=vmem, size = 0x12000, scoped, tag = 'internal scratch']
  %s0 = inlined_call_operand.vmem [shape: s32[16,8], index: 0, kind: input, shape index: {}]
  %s1 = inlined_call_operand.vmem [shape: s32[16,8], index: 1, kind: input, shape index: {}]
  %s2 = inlined_call_operand.vmem [shape: s32[16,8], index: 2, kind: input, shape index: {}]
  %s3 = inlined_call_operand.hbm [shape: f32[128,128], index: 3, kind: input, shape index: {}]
  %s4 = inlined_call_operand.hbm [shape: f32[128,128], index: 4, kind: input, shape index: {}]
  %s5 = inlined_call_operand.hbm [shape: f32[128,128], index: 5, kind: input, shape index: {}]
  %s6 = inlined_call_operand.vmem [shape: f32[1,128], index: 6, kind: input, shape index: {}]
  %s7 = inlined_call_operand.hbm [shape: f32[128,128], index: 7, kind: input, shape index: {}]
  %s8 = inlined_call_operand.vmem [shape: f32[1,128], index: 8, kind: input, shape index: {}]
  %s9 = inlined_call_operand.hbm [shape: f32[16,128], index: 9, kind: output, shape index: {}]
  %s10 = sld [smem:[#allocation0]]
  $region62: #{tpu_custom_call.1} parent=0
    _
  %s12 = ssub.s32 1, %s10
  %s13 = scalar_select 0, %s12, %s10
  $region1: #{tpu_custom_call.1} parent=0
    #allocation2 [shape = 'u8[65536]{0}', space=vmem, size = 0x10000, scoped, tag = 'input window, operand 3, single buffered']
    #allocation3 [shape = 's32[1]{0}', space=sflag, size = 0x4, scoped, tag = 'scoped memory for tpu_custom_call.1']
    #allocation4 [shape = 's32[1]{0}', space=sflag, size = 0x4, scoped, tag = 'scoped memory for tpu_custom_call.1']
    #allocation5 [shape = 'u8[65536]{0}', space=vmem, size = 0x10000, scoped, tag = 'input window, operand 4, single buffered']
    #allocation6 [shape = 's32[1]{0}', space=sflag, size = 0x4, scoped, tag = 'scoped memory for tpu_custom_call.1']
    #allocation7 [shape = 'u8[65536]{0}', space=vmem, size = 0x10000, scoped, tag = 'input window, operand 5, single buffered']
    #allocation8 [shape = 'u8[65536]{0}', space=vmem, size = 0x10000, scoped, tag = 'input window, operand 7, single buffered']
    #allocation9 [shape = 's32[1]{0}', space=sflag, size = 0x4, scoped, tag = 'scoped memory for tpu_custom_call.1']
    #allocation10 [shape = 'u8[8192]{0}', space=vmem, size = 0x2000, scoped, tag = 'output window, operand 0, single buffered']
    %14 = vsyncpa [#allocation3], 0
    %15 = vsyncpa [#allocation6], 0
    %16 = vsyncpa [#allocation9], 0
    %17 = vsyncpa [#allocation4], 0
    // Predicated region
    $region2: #{tpu_custom_call.1} parent=1 // pred_check
      _
    $region3: #{tpu_custom_call.1} parent=1 // pred_check_branch
      %19 = sbr.rel (0) target = $region5
    $region4: #{tpu_custom_call.1} parent=1 // pred_region
      _
    $region5: #{tpu_custom_call.1} parent=1 // pred_fallthru
      _
    // Predicated region
    $region6: #{tpu_custom_call.1} parent=1 // pred_check
      _
    $region7: #{tpu_custom_call.1} parent=1 // pred_check_branch
      %21 = sbr.rel (0) target = $region9
    $region8: #{tpu_custom_call.1} parent=1 // pred_region
      _
    $region9: #{tpu_custom_call.1} parent=1 // pred_fallthru
      _
    // Predicated region
    $region10: #{tpu_custom_call.1} parent=1 // pred_check
      _
    $region11: #{tpu_custom_call.1} parent=1 // pred_check_branch
      %23 = sbr.rel (0) target = $region13
    $region12: #{tpu_custom_call.1} parent=1 // pred_region
      _
    $region13: #{tpu_custom_call.1} parent=1 // pred_fallthru
      _
    // Predicated region
    $region14: #{tpu_custom_call.1} parent=1 // pred_check
      _
    $region15: #{tpu_custom_call.1} parent=1 // pred_check_branch
      %25 = sbr.rel (0) target = $region17
    $region16: #{tpu_custom_call.1} parent=1 // pred_region
      %s27 = ssub.s32 2048, 2048
      %28 = vsyncadd [#allocation3], %s27
      %s29 = sshll.u32 [#allocation2], 4
      %s30 = int_to_ptr.vmem [resolvable:$true] %s29
      %35 = dma.hbm_to_vmem [thread:$0]  %s3, 2048, %s30, [#allocation3], 128, 128, 8
    $region17: #{tpu_custom_call.1} parent=1 // pred_fallthru
      _
    // Predicated region
    $region18: #{tpu_custom_call.1} parent=1 // pred_check
      _
    $region19: #{tpu_custom_call.1} parent=1 // pred_check_branch
      %37 = sbr.rel (0) target = $region21
    $region20: #{tpu_custom_call.1} parent=1 // pred_region
      %s39 = ssub.s32 2048, 2048
      %40 = vsyncadd [#allocation6], %s39
      %s41 = sshll.u32 [#allocation5], 4
      %s42 = int_to_ptr.vmem [resolvable:$true] %s41
      %47 = dma.hbm_to_vmem [thread:$0]  %s4, 2048, %s42, [#allocation6], 128, 128, 8
    $region21: #{tpu_custom_call.1} parent=1 // pred_fallthru
      _
    // Predicated region
    $region22: #{tpu_custom_call.1} parent=1 // pred_check
      _
    $region23: #{tpu_custom_call.1} parent=1 // pred_check_branch
      %49 = sbr.rel (0) target = $region25
    $region24: #{tpu_custom_call.1} parent=1 // pred_region
      %s51 = ssub.s32 2048, 2048
      %52 = vsyncadd [#allocation6], %s51
      %s53 = sshll.u32 [#allocation7], 4
      %s54 = int_to_ptr.vmem [resolvable:$true] %s53
      %59 = dma.hbm_to_vmem [thread:$0]  %s5, 2048, %s54, [#allocation6], 128, 128, 8
    $region25: #{tpu_custom_call.1} parent=1 // pred_fallthru
      _
    // Predicated region
    $region26: #{tpu_custom_call.1} parent=1 // pred_check
      _
    $region27: #{tpu_custom_call.1} parent=1 // pred_check_branch
      %61 = sbr.rel (0) target = $region29
    $region28: #{tpu_custom_call.1} parent=1 // pred_region
      _
    $region29: #{tpu_custom_call.1} parent=1 // pred_fallthru
      _
    // Predicated region
    $region30: #{tpu_custom_call.1} parent=1 // pred_check
      _
    $region31: #{tpu_custom_call.1} parent=1 // pred_check_branch
      %63 = sbr.rel (0) target = $region33
    $region32: #{tpu_custom_call.1} parent=1 // pred_region
      %s65 = ssub.s32 2048, 2048
      %66 = vsyncadd [#allocation9], %s65
      %s67 = sshll.u32 [#allocation8], 4
      %s68 = int_to_ptr.vmem [resolvable:$true] %s67
      %73 = dma.hbm_to_vmem [thread:$0]  %s7, 2048, %s68, [#allocation9], 128, 128, 8
    $region33: #{tpu_custom_call.1} parent=1 // pred_fallthru
      _
    // Predicated region
    $region34: #{tpu_custom_call.1} parent=1 // pred_check
      _
    $region35: #{tpu_custom_call.1} parent=1 // pred_check_branch
      %75 = sbr.rel (0) target = $region37
    $region36: #{tpu_custom_call.1} parent=1 // pred_region
      _
    $region37: #{tpu_custom_call.1} parent=1 // pred_fallthru
      _
    // Predicated region
    $region38: #{tpu_custom_call.1} parent=1 // pred_check
      _
    $region39: #{tpu_custom_call.1} parent=1 // pred_check_branch
      %77 = sbr.rel (0) target = $region41
    $region40: #{tpu_custom_call.1} parent=1 // pred_region
      %78 = dma.done [#allocation3], 2048
    $region41: #{tpu_custom_call.1} parent=1 // pred_fallthru
      _
    // Predicated region
    $region42: #{tpu_custom_call.1} parent=1 // pred_check
      _
    $region43: #{tpu_custom_call.1} parent=1 // pred_check_branch
      %80 = sbr.rel (0) target = $region45
    $region44: #{tpu_custom_call.1} parent=1 // pred_region
      %81 = dma.done [#allocation6], 2048
    $region45: #{tpu_custom_call.1} parent=1 // pred_fallthru
      _
    // Predicated region
    $region46: #{tpu_custom_call.1} parent=1 // pred_check
      _
    $region47: #{tpu_custom_call.1} parent=1 // pred_check_branch
      %83 = sbr.rel (0) target = $region49
    $region48: #{tpu_custom_call.1} parent=1 // pred_region
      %84 = dma.done [#allocation6], 2048
    $region49: #{tpu_custom_call.1} parent=1 // pred_fallthru
      _
    // Predicated region
    $region50: #{tpu_custom_call.1} parent=1 // pred_check
      _
    $region51: #{tpu_custom_call.1} parent=1 // pred_check_branch
      %86 = sbr.rel (0) target = $region53
    $region52: #{tpu_custom_call.1} parent=1 // pred_region
      %87 = dma.done [#allocation9], 2048
    $region53: #{tpu_custom_call.1} parent=1 // pred_fallthru
      _
    %v88 = vlaneseq
    %v89 = vand.u32 %v88, 127
    %v90 = vld [vmem:[%s0] sm:$0xff]
    %v91 = vld [vmem:[%s0 + $0x8] sm:$0xff]
    %92 = vset.pattern.permute.xlu0 0
    %93 = vperm.xlu0 %92, %v90
    %v94 = vpop.permute.xlu0 %93
    %95 = vset.pattern.permute.xlu0 0
    %96 = vperm.xlu0 %95, %v91
    %v97 = vpop.permute.xlu0 %96
    %vm98 = vcmp.eq.s32.totalorder %v94, %v89
    %vm99 = vcmp.eq.s32.totalorder %v97, %v89
    %v100 = vsel %vm98, 1, 0
    %v101 = vsel %vm99, 1, 0
    %v102 = vcvt.s32.f32 %v100
    %v103 = vcvt.s32.f32 %v101
    %v104 = vadd.f32 %v102, 0.0
    %v105 = vadd.f32 %v103, 0.0
    %106 = vset.pattern.permute.xlu0 1
    %107 = vperm.xlu0 %106, %v90
    %v108 = vpop.permute.xlu0 %107
    %109 = vset.pattern.permute.xlu0 1
    %110 = vperm.xlu0 %109, %v91
    %v111 = vpop.permute.xlu0 %110
    %vm112 = vcmp.eq.s32.totalorder %v108, %v89
    %vm113 = vcmp.eq.s32.totalorder %v111, %v89
    %v114 = vsel %vm112, 1, 0
    %v115 = vsel %vm113, 1, 0
    %v116 = vcvt.s32.f32 %v114
    %v117 = vcvt.s32.f32 %v115
    %v118 = vadd.f32 %v104, %v116
    %v119 = vadd.f32 %v105, %v117
    %120 = vset.pattern.permute.xlu0 2
    %121 = vperm.xlu0 %120, %v90
    %v122 = vpop.permute.xlu0 %121
    %123 = vset.pattern.permute.xlu0 2
    %124 = vperm.xlu0 %123, %v91
    %v125 = vpop.permute.xlu0 %124
    %vm126 = vcmp.eq.s32.totalorder %v122, %v89
    %vm127 = vcmp.eq.s32.totalorder %v125, %v89
    %v128 = vsel %vm126, 1, 0
    %v129 = vsel %vm127, 1, 0
    %v130 = vcvt.s32.f32 %v128
    %v131 = vcvt.s32.f32 %v129
    %v132 = vadd.f32 %v118, %v130
    %v133 = vadd.f32 %v119, %v131
    %134 = vset.pattern.permute.xlu0 3
    %135 = vperm.xlu0 %134, %v90
    %v136 = vpop.permute.xlu0 %135
    %137 = vset.pattern.permute.xlu0 3
    %138 = vperm.xlu0 %137, %v91
    %v139 = vpop.permute.xlu0 %138
    %vm140 = vcmp.eq.s32.totalorder %v136, %v89
    %vm141 = vcmp.eq.s32.totalorder %v139, %v89
    %v142 = vsel %vm140, 1, 0
    %v143 = vsel %vm141, 1, 0
    %v144 = vcvt.s32.f32 %v142
    %v145 = vcvt.s32.f32 %v143
    %v146 = vadd.f32 %v132, %v144
    %v147 = vadd.f32 %v133, %v145
    %148 = vset.pattern.permute.xlu0 4
    %149 = vperm.xlu0 %148, %v90
    %v150 = vpop.permute.xlu0 %149
    %151 = vset.pattern.permute.xlu0 4
    %152 = vperm.xlu0 %151, %v91
    %v153 = vpop.permute.xlu0 %152
    %vm154 = vcmp.eq.s32.totalorder %v150, %v89
    %vm155 = vcmp.eq.s32.totalorder %v153, %v89
    %v156 = vsel %vm154, 1, 0
    %v157 = vsel %vm155, 1, 0
    %v158 = vcvt.s32.f32 %v156
    %v159 = vcvt.s32.f32 %v157
    %v160 = vadd.f32 %v146, %v158
    %v161 = vadd.f32 %v147, %v159
    %162 = vset.pattern.permute.xlu0 5
    %163 = vperm.xlu0 %162, %v90
    %v164 = vpop.permute.xlu0 %163
    %165 = vset.pattern.permute.xlu0 5
    %166 = vperm.xlu0 %165, %v91
    %v167 = vpop.permute.xlu0 %166
    %vm168 = vcmp.eq.s32.totalorder %v164, %v89
    %vm169 = vcmp.eq.s32.totalorder %v167, %v89
    %v170 = vsel %vm168, 1, 0
    %v171 = vsel %vm169, 1, 0
    %v172 = vcvt.s32.f32 %v170
    %v173 = vcvt.s32.f32 %v171
    %v174 = vadd.f32 %v160, %v172
    %v175 = vadd.f32 %v161, %v173
    %176 = vset.pattern.permute.xlu0 6
    %177 = vperm.xlu0 %176, %v90
    %v178 = vpop.permute.xlu0 %177
    %179 = vset.pattern.permute.xlu0 6
    %180 = vperm.xlu0 %179, %v91
    %v181 = vpop.permute.xlu0 %180
    %vm182 = vcmp.eq.s32.totalorder %v178, %v89
    %vm183 = vcmp.eq.s32.totalorder %v181, %v89
    %v184 = vsel %vm182, 1, 0
    %v185 = vsel %vm183, 1, 0
    %v186 = vcvt.s32.f32 %v184
    %v187 = vcvt.s32.f32 %v185
    %v188 = vadd.f32 %v174, %v186
    %v189 = vadd.f32 %v175, %v187
    %190 = vset.pattern.permute.xlu0 7
    %191 = vperm.xlu0 %190, %v90
    %v192 = vpop.permute.xlu0 %191
    %193 = vset.pattern.permute.xlu0 7
    %194 = vperm.xlu0 %193, %v91
    %v195 = vpop.permute.xlu0 %194
    %vm196 = vcmp.eq.s32.totalorder %v192, %v89
    %vm197 = vcmp.eq.s32.totalorder %v195, %v89
    %v198 = vsel %vm196, 1, 0
    %v199 = vsel %vm197, 1, 0
    %v200 = vcvt.s32.f32 %v198
    %v201 = vcvt.s32.f32 %v199
    %v202 = vadd.f32 %v188, %v200
    %v203 = vadd.f32 %v189, %v201
    %v204 = vld [vmem:[%s1] sm:$0xff]
    %v205 = vld [vmem:[%s1 + $0x8] sm:$0xff]
    %206 = vset.pattern.permute.xlu0 0
    %207 = vperm.xlu0 %206, %v204
    %v208 = vpop.permute.xlu0 %207
    %209 = vset.pattern.permute.xlu0 0
    %210 = vperm.xlu0 %209, %v205
    %v211 = vpop.permute.xlu0 %210
    %vm212 = vcmp.eq.s32.totalorder %v208, %v89
    %vm213 = vcmp.eq.s32.totalorder %v211, %v89
    %v214 = vsel %vm212, 1, 0
    %v215 = vsel %vm213, 1, 0
    %v216 = vcvt.s32.f32 %v214
    %v217 = vcvt.s32.f32 %v215
    %v218 = vadd.f32 %v216, 0.0
    %v219 = vadd.f32 %v217, 0.0
    %220 = vset.pattern.permute.xlu0 1
    %221 = vperm.xlu0 %220, %v204
    %v222 = vpop.permute.xlu0 %221
    %223 = vset.pattern.permute.xlu0 1
    %224 = vperm.xlu0 %223, %v205
    %v225 = vpop.permute.xlu0 %224
    %vm226 = vcmp.eq.s32.totalorder %v222, %v89
    %vm227 = vcmp.eq.s32.totalorder %v225, %v89
    %v228 = vsel %vm226, 1, 0
    %v229 = vsel %vm227, 1, 0
    %v230 = vcvt.s32.f32 %v228
    %v231 = vcvt.s32.f32 %v229
    %v232 = vadd.f32 %v218, %v230
    %v233 = vadd.f32 %v219, %v231
    %234 = vset.pattern.permute.xlu0 2
    %235 = vperm.xlu0 %234, %v204
    %v236 = vpop.permute.xlu0 %235
    %237 = vset.pattern.permute.xlu0 2
    %238 = vperm.xlu0 %237, %v205
    %v239 = vpop.permute.xlu0 %238
    %vm240 = vcmp.eq.s32.totalorder %v236, %v89
    %vm241 = vcmp.eq.s32.totalorder %v239, %v89
    %v242 = vsel %vm240, 1, 0
    %v243 = vsel %vm241, 1, 0
    %v244 = vcvt.s32.f32 %v242
    %v245 = vcvt.s32.f32 %v243
    %v246 = vadd.f32 %v232, %v244
    %v247 = vadd.f32 %v233, %v245
    %248 = vset.pattern.permute.xlu0 3
    %249 = vperm.xlu0 %248, %v204
    %v250 = vpop.permute.xlu0 %249
    %251 = vset.pattern.permute.xlu0 3
    %252 = vperm.xlu0 %251, %v205
    %v253 = vpop.permute.xlu0 %252
    %vm254 = vcmp.eq.s32.totalorder %v250, %v89
    %vm255 = vcmp.eq.s32.totalorder %v253, %v89
    %v256 = vsel %vm254, 1, 0
    %v257 = vsel %vm255, 1, 0
    %v258 = vcvt.s32.f32 %v256
    %v259 = vcvt.s32.f32 %v257
    %v260 = vadd.f32 %v246, %v258
    %v261 = vadd.f32 %v247, %v259
    %262 = vset.pattern.permute.xlu0 4
    %263 = vperm.xlu0 %262, %v204
    %v264 = vpop.permute.xlu0 %263
    %265 = vset.pattern.permute.xlu0 4
    %266 = vperm.xlu0 %265, %v205
    %v267 = vpop.permute.xlu0 %266
    %vm268 = vcmp.eq.s32.totalorder %v264, %v89
    %vm269 = vcmp.eq.s32.totalorder %v267, %v89
    %v270 = vsel %vm268, 1, 0
    %v271 = vsel %vm269, 1, 0
    %v272 = vcvt.s32.f32 %v270
    %v273 = vcvt.s32.f32 %v271
    %v274 = vadd.f32 %v260, %v272
    %v275 = vadd.f32 %v261, %v273
    %276 = vset.pattern.permute.xlu0 5
    %277 = vperm.xlu0 %276, %v204
    %v278 = vpop.permute.xlu0 %277
    %279 = vset.pattern.permute.xlu0 5
    %280 = vperm.xlu0 %279, %v205
    %v281 = vpop.permute.xlu0 %280
    %vm282 = vcmp.eq.s32.totalorder %v278, %v89
    %vm283 = vcmp.eq.s32.totalorder %v281, %v89
    %v284 = vsel %vm282, 1, 0
    %v285 = vsel %vm283, 1, 0
    %v286 = vcvt.s32.f32 %v284
    %v287 = vcvt.s32.f32 %v285
    %v288 = vadd.f32 %v274, %v286
    %v289 = vadd.f32 %v275, %v287
    %290 = vset.pattern.permute.xlu0 6
    %291 = vperm.xlu0 %290, %v204
    %v292 = vpop.permute.xlu0 %291
    %293 = vset.pattern.permute.xlu0 6
    %294 = vperm.xlu0 %293, %v205
    %v295 = vpop.permute.xlu0 %294
    %vm296 = vcmp.eq.s32.totalorder %v292, %v89
    %vm297 = vcmp.eq.s32.totalorder %v295, %v89
    %v298 = vsel %vm296, 1, 0
    %v299 = vsel %vm297, 1, 0
    %v300 = vcvt.s32.f32 %v298
    %v301 = vcvt.s32.f32 %v299
    %v302 = vadd.f32 %v288, %v300
    %v303 = vadd.f32 %v289, %v301
    %304 = vset.pattern.permute.xlu0 7
    %305 = vperm.xlu0 %304, %v204
    %v306 = vpop.permute.xlu0 %305
    %307 = vset.pattern.permute.xlu0 7
    %308 = vperm.xlu0 %307, %v205
    %v309 = vpop.permute.xlu0 %308
    %vm310 = vcmp.eq.s32.totalorder %v306, %v89
    %vm311 = vcmp.eq.s32.totalorder %v309, %v89
    %v312 = vsel %vm310, 1, 0
    %v313 = vsel %vm311, 1, 0
    %v314 = vcvt.s32.f32 %v312
    %v315 = vcvt.s32.f32 %v313
    %v316 = vadd.f32 %v302, %v314
    %v317 = vadd.f32 %v303, %v315
    %v318 = vld [vmem:[%s2] sm:$0xff]
    %v319 = vld [vmem:[%s2 + $0x8] sm:$0xff]
    %320 = vset.pattern.permute.xlu0 0
    %321 = vperm.xlu0 %320, %v318
    %v322 = vpop.permute.xlu0 %321
    %323 = vset.pattern.permute.xlu0 0
    %324 = vperm.xlu0 %323, %v319
    %v325 = vpop.permute.xlu0 %324
    %vm326 = vcmp.eq.s32.totalorder %v322, %v89
    %vm327 = vcmp.eq.s32.totalorder %v325, %v89
    %v328 = vsel %vm326, 1, 0
    %v329 = vsel %vm327, 1, 0
    %v330 = vcvt.s32.f32 %v328
    %v331 = vcvt.s32.f32 %v329
    %v332 = vadd.f32 %v330, 0.0
    %v333 = vadd.f32 %v331, 0.0
    %334 = vset.pattern.permute.xlu0 1
    %335 = vperm.xlu0 %334, %v318
    %v336 = vpop.permute.xlu0 %335
    %337 = vset.pattern.permute.xlu0 1
    %338 = vperm.xlu0 %337, %v319
    %v339 = vpop.permute.xlu0 %338
    %vm340 = vcmp.eq.s32.totalorder %v336, %v89
    %vm341 = vcmp.eq.s32.totalorder %v339, %v89
    %v342 = vsel %vm340, 1, 0
    %v343 = vsel %vm341, 1, 0
    %v344 = vcvt.s32.f32 %v342
    %v345 = vcvt.s32.f32 %v343
    %v346 = vadd.f32 %v332, %v344
    %v347 = vadd.f32 %v333, %v345
    %348 = vset.pattern.permute.xlu0 2
    %349 = vperm.xlu0 %348, %v318
    %v350 = vpop.permute.xlu0 %349
    %351 = vset.pattern.permute.xlu0 2
    %352 = vperm.xlu0 %351, %v319
    %v353 = vpop.permute.xlu0 %352
    %vm354 = vcmp.eq.s32.totalorder %v350, %v89
    %vm355 = vcmp.eq.s32.totalorder %v353, %v89
    %v356 = vsel %vm354, 1, 0
    %v357 = vsel %vm355, 1, 0
    %v358 = vcvt.s32.f32 %v356
    %v359 = vcvt.s32.f32 %v357
    %v360 = vadd.f32 %v346, %v358
    %v361 = vadd.f32 %v347, %v359
    %362 = vset.pattern.permute.xlu0 3
    %363 = vperm.xlu0 %362, %v318
    %v364 = vpop.permute.xlu0 %363
    %365 = vset.pattern.permute.xlu0 3
    %366 = vperm.xlu0 %365, %v319
    %v367 = vpop.permute.xlu0 %366
    %vm368 = vcmp.eq.s32.totalorder %v364, %v89
    %vm369 = vcmp.eq.s32.totalorder %v367, %v89
    %v370 = vsel %vm368, 1, 0
    %v371 = vsel %vm369, 1, 0
    %v372 = vcvt.s32.f32 %v370
    %v373 = vcvt.s32.f32 %v371
    %v374 = vadd.f32 %v360, %v372
    %v375 = vadd.f32 %v361, %v373
    %376 = vset.pattern.permute.xlu0 4
    %377 = vperm.xlu0 %376, %v318
    %v378 = vpop.permute.xlu0 %377
    %379 = vset.pattern.permute.xlu0 4
    %380 = vperm.xlu0 %379, %v319
    %v381 = vpop.permute.xlu0 %380
    %vm382 = vcmp.eq.s32.totalorder %v378, %v89
    %vm383 = vcmp.eq.s32.totalorder %v381, %v89
    %v384 = vsel %vm382, 1, 0
    %v385 = vsel %vm383, 1, 0
    %v386 = vcvt.s32.f32 %v384
    %v387 = vcvt.s32.f32 %v385
    %v388 = vadd.f32 %v374, %v386
    %v389 = vadd.f32 %v375, %v387
    %390 = vset.pattern.permute.xlu0 5
    %391 = vperm.xlu0 %390, %v318
    %v392 = vpop.permute.xlu0 %391
    %393 = vset.pattern.permute.xlu0 5
    %394 = vperm.xlu0 %393, %v319
    %v395 = vpop.permute.xlu0 %394
    %vm396 = vcmp.eq.s32.totalorder %v392, %v89
    %vm397 = vcmp.eq.s32.totalorder %v395, %v89
    %v398 = vsel %vm396, 1, 0
    %v399 = vsel %vm397, 1, 0
    %v400 = vcvt.s32.f32 %v398
    %v401 = vcvt.s32.f32 %v399
    %v402 = vadd.f32 %v388, %v400
    %v403 = vadd.f32 %v389, %v401
    %404 = vset.pattern.permute.xlu0 6
    %405 = vperm.xlu0 %404, %v318
    %v406 = vpop.permute.xlu0 %405
    %407 = vset.pattern.permute.xlu0 6
    %408 = vperm.xlu0 %407, %v319
    %v409 = vpop.permute.xlu0 %408
    %vm410 = vcmp.eq.s32.totalorder %v406, %v89
    %vm411 = vcmp.eq.s32.totalorder %v409, %v89
    %v412 = vsel %vm410, 1, 0
    %v413 = vsel %vm411, 1, 0
    %v414 = vcvt.s32.f32 %v412
    %v415 = vcvt.s32.f32 %v413
    %v416 = vadd.f32 %v402, %v414
    %v417 = vadd.f32 %v403, %v415
    %418 = vset.pattern.permute.xlu0 7
    %419 = vperm.xlu0 %418, %v318
    %v420 = vpop.permute.xlu0 %419
    %421 = vset.pattern.permute.xlu0 7
    %422 = vperm.xlu0 %421, %v319
    %v423 = vpop.permute.xlu0 %422
    %vm424 = vcmp.eq.s32.totalorder %v420, %v89
    %vm425 = vcmp.eq.s32.totalorder %v423, %v89
    %v426 = vsel %vm424, 1, 0
    %v427 = vsel %vm425, 1, 0
    %v428 = vcvt.s32.f32 %v426
    %v429 = vcvt.s32.f32 %v427
    %v430 = vadd.f32 %v416, %v428
    %v431 = vadd.f32 %v417, %v429
    %v432 = vld [vmem:[#allocation2] sm:$0xff]
    %v433 = vld [vmem:[#allocation2 + $0x8] sm:$0xff]
    %v434 = vld [vmem:[#allocation2 + $0x10] sm:$0xff]
    %v435 = vld [vmem:[#allocation2 + $0x18] sm:$0xff]
    %v436 = vld [vmem:[#allocation2 + $0x20] sm:$0xff]
    %v437 = vld [vmem:[#allocation2 + $0x28] sm:$0xff]
    %v438 = vld [vmem:[#allocation2 + $0x30] sm:$0xff]
    %v439 = vld [vmem:[#allocation2 + $0x38] sm:$0xff]
    %v440 = vld [vmem:[#allocation2 + $0x40] sm:$0xff]
    %v441 = vld [vmem:[#allocation2 + $0x48] sm:$0xff]
    %v442 = vld [vmem:[#allocation2 + $0x50] sm:$0xff]
    %v443 = vld [vmem:[#allocation2 + $0x58] sm:$0xff]
    %v444 = vld [vmem:[#allocation2 + $0x60] sm:$0xff]
    %v445 = vld [vmem:[#allocation2 + $0x68] sm:$0xff]
    %v446 = vld [vmem:[#allocation2 + $0x70] sm:$0xff]
    %v447 = vld [vmem:[#allocation2 + $0x78] sm:$0xff]
    %v448 = vld [vmem:[#allocation5] sm:$0xff]
    %v449 = vld [vmem:[#allocation5 + $0x8] sm:$0xff]
    %v450 = vld [vmem:[#allocation5 + $0x10] sm:$0xff]
    %v451 = vld [vmem:[#allocation5 + $0x18] sm:$0xff]
    %v452 = vld [vmem:[#allocation5 + $0x20] sm:$0xff]
    %v453 = vld [vmem:[#allocation5 + $0x28] sm:$0xff]
    %v454 = vld [vmem:[#allocation5 + $0x30] sm:$0xff]
    %v455 = vld [vmem:[#allocation5 + $0x38] sm:$0xff]
    %v456 = vld [vmem:[#allocation5 + $0x40] sm:$0xff]
    %v457 = vld [vmem:[#allocation5 + $0x48] sm:$0xff]
    %v458 = vld [vmem:[#allocation5 + $0x50] sm:$0xff]
    %v459 = vld [vmem:[#allocation5 + $0x58] sm:$0xff]
    %v460 = vld [vmem:[#allocation5 + $0x60] sm:$0xff]
    %v461 = vld [vmem:[#allocation5 + $0x68] sm:$0xff]
    %v462 = vld [vmem:[#allocation5 + $0x70] sm:$0xff]
    %v463 = vld [vmem:[#allocation5 + $0x78] sm:$0xff]
    %464 = vmatprep.subr.mxu0 0.0
    %465 = vmatpush1.msra.mxu0 %v448
    %466 = vmatprep.subr.mxu0 0.0
    %467 = vmatpush1.msra.mxu0 %v449
    %468 = vmatprep.subr.mxu0 0.0
    %469 = vmatpush1.msra.mxu0 %v450
    %470 = vmatprep.subr.mxu0 0.0
    %471 = vmatpush1.msra.mxu0 %v451
    %472 = vmatprep.subr.mxu0 0.0
    %473 = vmatpush1.msra.mxu0 %v452
    %474 = vmatprep.subr.mxu0 0.0
    %475 = vmatpush1.msra.mxu0 %v453
    %476 = vmatprep.subr.mxu0 0.0
    %477 = vmatpush1.msra.mxu0 %v454
    %478 = vmatprep.subr.mxu0 0.0
    %479 = vmatpush1.msra.mxu0 %v455
    %480 = vmatprep.subr.mxu0 0.0
    %481 = vmatpush1.msra.mxu0 %v456
    %482 = vmatprep.subr.mxu0 0.0
    %483 = vmatpush1.msra.mxu0 %v457
    %484 = vmatprep.subr.mxu0 0.0
    %485 = vmatpush1.msra.mxu0 %v458
    %486 = vmatprep.subr.mxu0 0.0
    %487 = vmatpush1.msra.mxu0 %v459
    %488 = vmatprep.subr.mxu0 0.0
    %489 = vmatpush1.msra.mxu0 %v460
    %490 = vmatprep.subr.mxu0 0.0
    %491 = vmatpush1.msra.mxu0 %v461
    %492 = vmatprep.subr.mxu0 0.0
    %493 = vmatpush1.msra.mxu0 %v462
    %494 = vmatprep.subr.mxu0 0.0
    %495 = vmatpush1.msra.mxu0 %v463
    %496 = vmatprep.subr.mxu0 0.0
    %497 = vmatpush1.msra.mxu0 0.0
    %498 = vmatprep.subr.mxu0 0.0
    %499 = vmatpush1.msra.mxu0 0.0
    %500 = vmatprep.subr.mxu0 0.0
    %501 = vmatpush1.msra.mxu0 0.0
    %502 = vmatprep.subr.mxu0 0.0
    %503 = vmatpush1.msra.mxu0 0.0
    %504 = vmatprep.subr.mxu0 0.0
    %505 = vmatpush1.msra.mxu0 0.0
    %506 = vmatprep.subr.mxu0 0.0
    %507 = vmatpush1.msra.mxu0 0.0
    %508 = vmatprep.subr.mxu0 0.0
    %509 = vmatpush1.msra.mxu0 0.0
    %510 = vmatprep.subr.mxu0 0.0
    %511 = vmatpush1.msra.mxu0 0.0
    %512 = vmatprep.subr.mxu0 0.0
    %513 = vmatpush1.msra.mxu0 0.0
    %514 = vmatprep.subr.mxu0 0.0
    %515 = vmatpush1.msra.mxu0 0.0
    %516 = vmatprep.subr.mxu0 0.0
    %517 = vmatpush1.msra.mxu0 0.0
    %518 = vmatprep.subr.mxu0 0.0
    %519 = vmatpush1.msra.mxu0 0.0
    %520 = vmatprep.subr.mxu0 0.0
    %521 = vmatpush1.msra.mxu0 0.0
    %522 = vmatprep.subr.mxu0 0.0
    %523 = vmatpush1.msra.mxu0 0.0
    %524 = vmatprep.subr.mxu0 0.0
    %525 = vmatpush1.msra.mxu0 0.0
    %526 = vmatprep.subr.mxu0 0.0
    %527 = vmatpush1.msra.mxu0 0.0
    %528 = vmatprep.mubr.f32.mxu0 0.0
    %529 = vmatmul.mubr.f32.gmra.mrb[0].mxu0 %v316
    %v530 = vpop.f32.mrb[0].mxu0
    %v531 = vadd.f32 0.0, %v530
    %v532 = vpop.f32.mrb[0].mxu0
    %533 = vmatprep.mubr.f32.mxu0 0.0
    %534 = vmatmul.mubr.f32.gmra.mrb[0].mxu0 %v317
    %v535 = vpop.f32.mrb[0].mxu0
    %v536 = vadd.f32 0.0, %v535
    %v537 = vpop.f32.mrb[0].mxu0
    %538 = vdwg.mxu0
    %539 = vmatprep.subr.mxu0 0.0
    %540 = vmatpush1.msra.mxu0 %v432
    %541 = vmatprep.subr.mxu0 0.0
    %542 = vmatpush1.msra.mxu0 %v433
    %543 = vmatprep.subr.mxu0 0.0
    %544 = vmatpush1.msra.mxu0 %v434
    %545 = vmatprep.subr.mxu0 0.0
    %546 = vmatpush1.msra.mxu0 %v435
    %547 = vmatprep.subr.mxu0 0.0
    %548 = vmatpush1.msra.mxu0 %v436
    %549 = vmatprep.subr.mxu0 0.0
    %550 = vmatpush1.msra.mxu0 %v437
    %551 = vmatprep.subr.mxu0 0.0
    %552 = vmatpush1.msra.mxu0 %v438
    %553 = vmatprep.subr.mxu0 0.0
    %554 = vmatpush1.msra.mxu0 %v439
    %555 = vmatprep.subr.mxu0 0.0
    %556 = vmatpush1.msra.mxu0 %v440
    %557 = vmatprep.subr.mxu0 0.0
    %558 = vmatpush1.msra.mxu0 %v441
    %559 = vmatprep.subr.mxu0 0.0
    %560 = vmatpush1.msra.mxu0 %v442
    %561 = vmatprep.subr.mxu0 0.0
    %562 = vmatpush1.msra.mxu0 %v443
    %563 = vmatprep.subr.mxu0 0.0
    %564 = vmatpush1.msra.mxu0 %v444
    %565 = vmatprep.subr.mxu0 0.0
    %566 = vmatpush1.msra.mxu0 %v445
    %567 = vmatprep.subr.mxu0 0.0
    %568 = vmatpush1.msra.mxu0 %v446
    %569 = vmatprep.subr.mxu0 0.0
    %570 = vmatpush1.msra.mxu0 %v447
    %571 = vmatprep.subr.mxu0 0.0
    %572 = vmatpush1.msra.mxu0 0.0
    %573 = vmatprep.subr.mxu0 0.0
    %574 = vmatpush1.msra.mxu0 0.0
    %575 = vmatprep.subr.mxu0 0.0
    %576 = vmatpush1.msra.mxu0 0.0
    %577 = vmatprep.subr.mxu0 0.0
    %578 = vmatpush1.msra.mxu0 0.0
    %579 = vmatprep.subr.mxu0 0.0
    %580 = vmatpush1.msra.mxu0 0.0
    %581 = vmatprep.subr.mxu0 0.0
    %582 = vmatpush1.msra.mxu0 0.0
    %583 = vmatprep.subr.mxu0 0.0
    %584 = vmatpush1.msra.mxu0 0.0
    %585 = vmatprep.subr.mxu0 0.0
    %586 = vmatpush1.msra.mxu0 0.0
    %587 = vmatprep.subr.mxu0 0.0
    %588 = vmatpush1.msra.mxu0 0.0
    %589 = vmatprep.subr.mxu0 0.0
    %590 = vmatpush1.msra.mxu0 0.0
    %591 = vmatprep.subr.mxu0 0.0
    %592 = vmatpush1.msra.mxu0 0.0
    %593 = vmatprep.subr.mxu0 0.0
    %594 = vmatpush1.msra.mxu0 0.0
    %595 = vmatprep.subr.mxu0 0.0
    %596 = vmatpush1.msra.mxu0 0.0
    %597 = vmatprep.subr.mxu0 0.0
    %598 = vmatpush1.msra.mxu0 0.0
    %599 = vmatprep.subr.mxu0 0.0
    %600 = vmatpush1.msra.mxu0 0.0
    %601 = vmatprep.subr.mxu0 0.0
    %602 = vmatpush1.msra.mxu0 0.0
    %603 = vmatprep.mubr.f32.mxu0 0.0
    %604 = vmatmul.mubr.f32.gmra.mrb[0].mxu0 %v202
    %v605 = vpop.f32.mrb[0].mxu0
    %v606 = vadd.f32 %v531, %v605
    %v607 = vpop.f32.mrb[0].mxu0
    %608 = vmatprep.mubr.f32.mxu0 0.0
    %609 = vmatmul.mubr.f32.gmra.mrb[0].mxu0 %v203
    %v610 = vpop.f32.mrb[0].mxu0
    %v611 = vadd.f32 %v536, %v610
    %v612 = vpop.f32.mrb[0].mxu0
    %613 = vdwg.mxu0
    %v614 = vld [vmem:[#allocation7] sm:$0xff]
    %v615 = vld [vmem:[#allocation7 + $0x8] sm:$0xff]
    %v616 = vld [vmem:[#allocation7 + $0x10] sm:$0xff]
    %v617 = vld [vmem:[#allocation7 + $0x18] sm:$0xff]
    %v618 = vld [vmem:[#allocation7 + $0x20] sm:$0xff]
    %v619 = vld [vmem:[#allocation7 + $0x28] sm:$0xff]
    %v620 = vld [vmem:[#allocation7 + $0x30] sm:$0xff]
    %v621 = vld [vmem:[#allocation7 + $0x38] sm:$0xff]
    %v622 = vld [vmem:[#allocation7 + $0x40] sm:$0xff]
    %v623 = vld [vmem:[#allocation7 + $0x48] sm:$0xff]
    %v624 = vld [vmem:[#allocation7 + $0x50] sm:$0xff]
    %v625 = vld [vmem:[#allocation7 + $0x58] sm:$0xff]
    %v626 = vld [vmem:[#allocation7 + $0x60] sm:$0xff]
    %v627 = vld [vmem:[#allocation7 + $0x68] sm:$0xff]
    %v628 = vld [vmem:[#allocation7 + $0x70] sm:$0xff]
    %v629 = vld [vmem:[#allocation7 + $0x78] sm:$0xff]
    %630 = vmatprep.subr.mxu0 0.0
    %631 = vmatpush1.msra.mxu0 %v614
    %632 = vmatprep.subr.mxu0 0.0
    %633 = vmatpush1.msra.mxu0 %v615
    %634 = vmatprep.subr.mxu0 0.0
    %635 = vmatpush1.msra.mxu0 %v616
    %636 = vmatprep.subr.mxu0 0.0
    %637 = vmatpush1.msra.mxu0 %v617
    %638 = vmatprep.subr.mxu0 0.0
    %639 = vmatpush1.msra.mxu0 %v618
    %640 = vmatprep.subr.mxu0 0.0
    %641 = vmatpush1.msra.mxu0 %v619
    %642 = vmatprep.subr.mxu0 0.0
    %643 = vmatpush1.msra.mxu0 %v620
    %644 = vmatprep.subr.mxu0 0.0
    %645 = vmatpush1.msra.mxu0 %v621
    %646 = vmatprep.subr.mxu0 0.0
    %647 = vmatpush1.msra.mxu0 %v622
    %648 = vmatprep.subr.mxu0 0.0
    %649 = vmatpush1.msra.mxu0 %v623
    %650 = vmatprep.subr.mxu0 0.0
    %651 = vmatpush1.msra.mxu0 %v624
    %652 = vmatprep.subr.mxu0 0.0
    %653 = vmatpush1.msra.mxu0 %v625
    %654 = vmatprep.subr.mxu0 0.0
    %655 = vmatpush1.msra.mxu0 %v626
    %656 = vmatprep.subr.mxu0 0.0
    %657 = vmatpush1.msra.mxu0 %v627
    %658 = vmatprep.subr.mxu0 0.0
    %659 = vmatpush1.msra.mxu0 %v628
    %660 = vmatprep.subr.mxu0 0.0
    %661 = vmatpush1.msra.mxu0 %v629
    %662 = vmatprep.subr.mxu0 0.0
    %663 = vmatpush1.msra.mxu0 0.0
    %664 = vmatprep.subr.mxu0 0.0
    %665 = vmatpush1.msra.mxu0 0.0
    %666 = vmatprep.subr.mxu0 0.0
    %667 = vmatpush1.msra.mxu0 0.0
    %668 = vmatprep.subr.mxu0 0.0
    %669 = vmatpush1.msra.mxu0 0.0
    %670 = vmatprep.subr.mxu0 0.0
    %671 = vmatpush1.msra.mxu0 0.0
    %672 = vmatprep.subr.mxu0 0.0
    %673 = vmatpush1.msra.mxu0 0.0
    %674 = vmatprep.subr.mxu0 0.0
    %675 = vmatpush1.msra.mxu0 0.0
    %676 = vmatprep.subr.mxu0 0.0
    %677 = vmatpush1.msra.mxu0 0.0
    %678 = vmatprep.subr.mxu0 0.0
    %679 = vmatpush1.msra.mxu0 0.0
    %680 = vmatprep.subr.mxu0 0.0
    %681 = vmatpush1.msra.mxu0 0.0
    %682 = vmatprep.subr.mxu0 0.0
    %683 = vmatpush1.msra.mxu0 0.0
    %684 = vmatprep.subr.mxu0 0.0
    %685 = vmatpush1.msra.mxu0 0.0
    %686 = vmatprep.subr.mxu0 0.0
    %687 = vmatpush1.msra.mxu0 0.0
    %688 = vmatprep.subr.mxu0 0.0
    %689 = vmatpush1.msra.mxu0 0.0
    %690 = vmatprep.subr.mxu0 0.0
    %691 = vmatpush1.msra.mxu0 0.0
    %692 = vmatprep.subr.mxu0 0.0
    %693 = vmatpush1.msra.mxu0 0.0
    %694 = vmatprep.mubr.f32.mxu0 0.0
    %695 = vmatmul.mubr.f32.gmra.mrb[0].mxu0 %v430
    %v696 = vpop.f32.mrb[0].mxu0
    %v697 = vadd.f32 0.0, %v696
    %v698 = vpop.f32.mrb[0].mxu0
    %699 = vmatprep.mubr.f32.mxu0 0.0
    %700 = vmatmul.mubr.f32.gmra.mrb[0].mxu0 %v431
    %v701 = vpop.f32.mrb[0].mxu0
    %v702 = vadd.f32 0.0, %v701
    %v703 = vpop.f32.mrb[0].mxu0
    %704 = vdwg.mxu0
    %v705 = vadd.f32 %v606, %v697
    %v706 = vadd.f32 %v611, %v702
    %v707 = vld [vmem:[%s6] sm:$0x1]
    %v709 = vlaneseq
    %v710 = vshrl.u32 %v709, 7
    %v711 = vsub.s32 0, %v710
    %v712 = vrot.slane %v707, %v711
    %v714 = vadd.f32 %v705, %v712
    %v715 = vadd.f32 %v706, %v712
    %v716 = vmax.f32 %v714, 0.0
    %v717 = vmax.f32 %v715, 0.0
    %v718 = vld [vmem:[#allocation8] sm:$0xff]
    %v719 = vld [vmem:[#allocation8 + $0x8] sm:$0xff]
    %v720 = vld [vmem:[#allocation8 + $0x10] sm:$0xff]
    %v721 = vld [vmem:[#allocation8 + $0x18] sm:$0xff]
    %v722 = vld [vmem:[#allocation8 + $0x20] sm:$0xff]
    %v723 = vld [vmem:[#allocation8 + $0x28] sm:$0xff]
    %v724 = vld [vmem:[#allocation8 + $0x30] sm:$0xff]
    %v725 = vld [vmem:[#allocation8 + $0x38] sm:$0xff]
    %v726 = vld [vmem:[#allocation8 + $0x40] sm:$0xff]
    %v727 = vld [vmem:[#allocation8 + $0x48] sm:$0xff]
    %v728 = vld [vmem:[#allocation8 + $0x50] sm:$0xff]
    %v729 = vld [vmem:[#allocation8 + $0x58] sm:$0xff]
    %v730 = vld [vmem:[#allocation8 + $0x60] sm:$0xff]
    %v731 = vld [vmem:[#allocation8 + $0x68] sm:$0xff]
    %v732 = vld [vmem:[#allocation8 + $0x70] sm:$0xff]
    %v733 = vld [vmem:[#allocation8 + $0x78] sm:$0xff]
    %v734 = vld [vmem:[%s8] sm:$0x1]
    %v736 = vlaneseq
    %v737 = vshrl.u32 %v736, 7
    %v738 = vsub.s32 0, %v737
    %v739 = vrot.slane %v734, %v738
    %741 = vmatprep.subr.mxu0 0.0
    %742 = vmatpush1.msra.mxu0 %v718
    %743 = vmatprep.subr.mxu0 0.0
    %744 = vmatpush1.msra.mxu0 %v719
    %745 = vmatprep.subr.mxu0 0.0
    %746 = vmatpush1.msra.mxu0 %v720
    %747 = vmatprep.subr.mxu0 0.0
    %748 = vmatpush1.msra.mxu0 %v721
    %749 = vmatprep.subr.mxu0 0.0
    %750 = vmatpush1.msra.mxu0 %v722
    %751 = vmatprep.subr.mxu0 0.0
    %752 = vmatpush1.msra.mxu0 %v723
    %753 = vmatprep.subr.mxu0 0.0
    %754 = vmatpush1.msra.mxu0 %v724
    %755 = vmatprep.subr.mxu0 0.0
    %756 = vmatpush1.msra.mxu0 %v725
    %757 = vmatprep.subr.mxu0 0.0
    %758 = vmatpush1.msra.mxu0 %v726
    %759 = vmatprep.subr.mxu0 0.0
    %760 = vmatpush1.msra.mxu0 %v727
    %761 = vmatprep.subr.mxu0 0.0
    %762 = vmatpush1.msra.mxu0 %v728
    %763 = vmatprep.subr.mxu0 0.0
    %764 = vmatpush1.msra.mxu0 %v729
    %765 = vmatprep.subr.mxu0 0.0
    %766 = vmatpush1.msra.mxu0 %v730
    %767 = vmatprep.subr.mxu0 0.0
    %768 = vmatpush1.msra.mxu0 %v731
    %769 = vmatprep.subr.mxu0 0.0
    %770 = vmatpush1.msra.mxu0 %v732
    %771 = vmatprep.subr.mxu0 0.0
    %772 = vmatpush1.msra.mxu0 %v733
    %773 = vmatprep.subr.mxu0 0.0
    %774 = vmatpush1.msra.mxu0 0.0
    %775 = vmatprep.subr.mxu0 0.0
    %776 = vmatpush1.msra.mxu0 0.0
    %777 = vmatprep.subr.mxu0 0.0
    %778 = vmatpush1.msra.mxu0 0.0
    %779 = vmatprep.subr.mxu0 0.0
    %780 = vmatpush1.msra.mxu0 0.0
    %781 = vmatprep.subr.mxu0 0.0
    %782 = vmatpush1.msra.mxu0 0.0
    %783 = vmatprep.subr.mxu0 0.0
    %784 = vmatpush1.msra.mxu0 0.0
    %785 = vmatprep.subr.mxu0 0.0
    %786 = vmatpush1.msra.mxu0 0.0
    %787 = vmatprep.subr.mxu0 0.0
    %788 = vmatpush1.msra.mxu0 0.0
    %789 = vmatprep.subr.mxu0 0.0
    %790 = vmatpush1.msra.mxu0 0.0
    %791 = vmatprep.subr.mxu0 0.0
    %792 = vmatpush1.msra.mxu0 0.0
    %793 = vmatprep.subr.mxu0 0.0
    %794 = vmatpush1.msra.mxu0 0.0
    %795 = vmatprep.subr.mxu0 0.0
    %796 = vmatpush1.msra.mxu0 0.0
    %797 = vmatprep.subr.mxu0 0.0
    %798 = vmatpush1.msra.mxu0 0.0
    %799 = vmatprep.subr.mxu0 0.0
    %800 = vmatpush1.msra.mxu0 0.0
    %801 = vmatprep.subr.mxu0 0.0
    %802 = vmatpush1.msra.mxu0 0.0
    %803 = vmatprep.subr.mxu0 0.0
    %804 = vmatpush1.msra.mxu0 0.0
    %805 = vmatprep.mubr.f32.mxu0 0.0
    %806 = vmatmul.mubr.f32.gmra.mrb[0].mxu0 %v716
    %v807 = vpop.f32.mrb[0].mxu0
    %v808 = vadd.f32 %v739, %v807
    %v809 = vpop.f32.mrb[0].mxu0
    %810 = vmatprep.mubr.f32.mxu0 0.0
    %811 = vmatmul.mubr.f32.gmra.mrb[0].mxu0 %v717
    %v812 = vpop.f32.mrb[0].mxu0
    %v813 = vadd.f32 %v739, %v812
    %v814 = vpop.f32.mrb[0].mxu0
    %815 = vdwg.mxu0
    %816 = vst [vmem:[#allocation10] sm:$0xff] %v808
    %817 = vst [vmem:[#allocation10 + $0x8] sm:$0xff] %v813
    // Predicated region
    $region54: #{tpu_custom_call.1} parent=1 // pred_check
      _
    $region55: #{tpu_custom_call.1} parent=1 // pred_check_branch
      %819 = sbr.rel (0) target = $region57
    $region56: #{tpu_custom_call.1} parent=1 // pred_region
      %s821 = ssub.s32 256, 256
      %822 = vsyncadd [#allocation4], %s821
      %s823 = sshll.u32 [#allocation10], 4
      %s824 = int_to_ptr.vmem [resolvable:$true] %s823
      %829 = dma.vmem_to_hbm [thread:$0]  %s824, 256, %s9, [#allocation4], 128, 128, 8
    $region57: #{tpu_custom_call.1} parent=1 // pred_fallthru
      _
    // Predicated region
    $region58: #{tpu_custom_call.1} parent=1 // pred_check
      _
    $region59: #{tpu_custom_call.1} parent=1 // pred_check_branch
      %831 = sbr.rel (0) target = $region61
    $region60: #{tpu_custom_call.1} parent=1 // pred_region
      %832 = dma.done [#allocation4], 256
    $region61: #{tpu_custom_call.1} parent=1 // pred_fallthru
      _
    %833 = vsyncpa [#allocation3], 1
    %834 = vsyncpa [#allocation6], 1
    %835 = vsyncpa [#allocation9], 1
    %836 = vsyncpa [#allocation4], 1

</llo_original>
